<compile_context>
chip_gen: v7x
topology: tpu7x:2x2x1
jax: 0.10.0
libtpu: 0.0.40
codegen_flags: <defaults>
</compile_context>

<pallas_src>
import functools

import jax
import jax.numpy as jnp
from jax.experimental import pallas as pl
from jax.experimental.pallas import tpu as pltpu


def _round_up(x, m):
    return (x + m - 1) // m * m


# bf16 packs 2 rows per 32-bit sublane; keep every parameter segment 16-row
# aligned so the static in-kernel slices never cross a (16,128) tile boundary.
_ROW_ALIGN = 16


def _actor_critic_kernel(x_ref, p_ref, out_ref, *,
                         k_pad, cols, off_b1, off_w2, off_b2, off_wh, off_bh):
    f32 = jnp.float32
    wdt = p_ref.dtype  # bf16

    # Static, 16-row-aligned slices of the packed parameter slab (no copies).
    w1 = p_ref[0:k_pad, :]                   # (k_pad, cols)  fc1 weight (zero-padded)
    b1 = p_ref[off_b1:off_b1 + 1, :].astype(f32)   # (1, cols)  fc1 bias
    w2 = p_ref[off_w2:off_w2 + cols, :]      # (cols, cols)   fc2 weight
    b2 = p_ref[off_b2:off_b2 + 1, :].astype(f32)   # (1, cols)  fc2 bias
    wh = p_ref[off_wh:off_wh + cols, :]      # (cols, cols)   merged actor|critic weight
    bh = p_ref[off_bh:off_bh + 1, :].astype(f32)   # (1, cols)  merged actor|critic bias

    x = x_ref[...]                            # (TB, k_pad) bf16 batch tile

    # fc1 + relu  (bf16 x bf16 -> f32 accumulate)
    h1 = jnp.dot(x, w1, preferred_element_type=f32)
    h1 = jnp.maximum(h1 + b1, 0.0).astype(wdt)   # back to bf16 for the next MXU pass
    # fc2 + relu
    h2 = jnp.dot(h1, w2, preferred_element_type=f32)
    h2 = jnp.maximum(h2 + b2, 0.0).astype(wdt)
    # merged heads -> single lane-dense (TB, cols) store
    out = jnp.dot(h2, wh, preferred_element_type=f32) + bh
    out_ref[...] = out.astype(out_ref.dtype)


def pack_params(params, n_states, n_actions, n_hid_1, n_hid_2, dtype=jnp.bfloat16):
    """Pack all weights/biases into one (rows, cols) bf16 slab, zero-padded so
    every segment is lane-dense (cols multiple of 128) and 16-row-aligned."""
    cols = _round_up(max(n_hid_1, n_hid_2, n_actions + 1), 128)
    k_pad = _round_up(n_states, _ROW_ALIGN)

    def pad2(a, rows):
        out = jnp.zeros((rows, cols), dtype)
        return out.at[: a.shape[0], : a.shape[1]].set(a.astype(dtype))

    # Merge actor + critic heads: columns [0, n_actions) = actor, column
    # n_actions = critic, rest zero.
    wh = jnp.concatenate([params["wa"], params["wc"]], axis=1)   # (n_hid_2, n_actions+1)
    bh = jnp.concatenate([params["ba"], params["bc"]], axis=1)   # (1, n_actions+1)

    segments = [
        pad2(params["w1"], k_pad),       # fc1 weight
        pad2(params["b1"], _ROW_ALIGN),  # fc1 bias (row 0 real, rest zero)
        pad2(params["w2"], cols),        # fc2 weight (zero rows beyond n_hid_1 are no-ops)
        pad2(params["b2"], _ROW_ALIGN),  # fc2 bias
        pad2(wh, cols),                  # merged head weight
        pad2(bh, _ROW_ALIGN),            # merged head bias
    ]
    packed = jnp.concatenate(segments, axis=0)

    meta = dict(
        k_pad=k_pad,
        cols=cols,
        off_b1=k_pad,
        off_w2=k_pad + _ROW_ALIGN,
        off_b2=k_pad + _ROW_ALIGN + cols,
        off_wh=k_pad + _ROW_ALIGN + cols + _ROW_ALIGN,
        off_bh=k_pad + _ROW_ALIGN + cols + _ROW_ALIGN + cols,
    )
    return packed, meta


def actor_critic_forward(state, packed, meta, n_actions, *, tb=128):
    """state: (B, n_states). packed/meta from pack_params().
    Returns (action_scores (B, n_actions) f32, value_est (B, 1) f32)."""
    B, n_states = state.shape
    k_pad, cols = meta["k_pad"], meta["cols"]

    # Pad the batch to a multiple of the tile and the contraction dim to the
    # packed K, casting activations to the weight dtype (bf16) for native MXU.
    b_pad = _round_up(B, tb)
    x = jnp.zeros((b_pad, k_pad), packed.dtype)
    x = x.at[:B, :n_states].set(state.astype(packed.dtype))

    kernel = functools.partial(_actor_critic_kernel, **meta)

    out = pl.pallas_call(
        kernel,
        out_shape=jax.ShapeDtypeStruct((b_pad, cols), jnp.float32),
        grid=(b_pad // tb,),
        in_specs=[
            # Batch tile of activations: double-buffered across grid steps.
            pl.BlockSpec((tb, k_pad), lambda i: (i, 0)),
            # Full weight slab with a constant index_map: DMA'd once,
            # VMEM-resident across all batch tiles.
            pl.BlockSpec(packed.shape, lambda i: (0, 0)),
        ],
        out_specs=pl.BlockSpec((tb, cols), lambda i: (i, 0)),
        compiler_params=pltpu.CompilerParams(
            dimension_semantics=("parallel",)),   # v7x: shard batch over 2 TCs
    )(x, packed)

    actor = out[:B, :n_actions]
    critic = out[:B, n_actions:n_actions + 1]
    return actor, critic


def init_params(key, n_states, n_actions, n_hid_1, n_hid_2):
    """Deterministic init mimicking PyTorch Linear's U(-1/sqrt(fan_in), 1/sqrt(fan_in))."""
    ks = jax.random.split(key, 8)

    def lin(kw, kb, fan_in, fan_out):
        bound = 1.0 / jnp.sqrt(float(fan_in))
        w = jax.random.uniform(kw, (fan_in, fan_out), jnp.float32, -bound, bound)
        b = jax.random.uniform(kb, (1, fan_out), jnp.float32, -bound, bound)
        return w, b

    w1, b1 = lin(ks[0], ks[1], n_states, n_hid_1)
    w2, b2 = lin(ks[2], ks[3], n_hid_1, n_hid_2)
    wa, ba = lin(ks[4], ks[5], n_hid_2, n_actions)
    wc, bc = lin(ks[6], ks[7], n_hid_2, 1)
    return dict(w1=w1, b1=b1, w2=w2, b2=b2, wa=wa, ba=ba, wc=wc, bc=bc)


def reference_forward(state, p):
    """Pure-JAX f32 reference matching the PyTorch module exactly."""
    h1 = jnp.maximum(state @ p["w1"] + p["b1"], 0.0)
    h2 = jnp.maximum(h1 @ p["w2"] + p["b2"], 0.0)
    return h2 @ p["wa"] + p["ba"], h2 @ p["wc"] + p["bc"]


if __name__ == "__main__":
    # LunarLander-v2-ish sizes: 8 state dims, 4 actions, hidden 128/128.
    n_states, n_actions, n_hid_1, n_hid_2 = 8, 4, 128, 128
    batch = 256   # a rollout chunk / vectorized envs per call (amortizes launch + weight DMA)
    tb = 128      # batch tile: 128 saturates v5e's MXU; use 256 on v6e/v7x at larger batches

    key = jax.random.PRNGKey(0)
    kp, kx = jax.random.split(key)
    params = init_params(kp, n_states, n_actions, n_hid_1, n_hid_2)
    state = jax.random.normal(kx, (batch, n_states), jnp.float32)

    # Pack weights ONCE in bf16 (kept resident / reused across rollout steps).
    packed, meta = pack_params(params, n_states, n_actions, n_hid_1, n_hid_2)
    packed = jax.block_until_ready(packed)

    fwd = jax.jit(lambda s, p: actor_critic_forward(s, p, meta, n_actions, tb=tb))
    actor, critic = fwd(state, packed)
    jax.block_until_ready((actor, critic))

    ref_actor, ref_critic = reference_forward(state, params)
    assert actor.shape == (batch, n_actions) and critic.shape == (batch, 1)
    # bf16 weights/activations with f32 accumulation -> loose tolerance vs f32 reference.
    assert jnp.allclose(actor, ref_actor, atol=5e-2, rtol=5e-2), \
        f"actor max err {float(jnp.max(jnp.abs(actor - ref_actor)))}"
    assert jnp.allclose(critic, ref_critic, atol=5e-2, rtol=5e-2), \
        f"critic max err {float(jnp.max(jnp.abs(critic - ref_critic)))}"

    print("KERNEL_OK")
</pallas_src>

<mosaic_0001>
module attributes {stable_mosaic.version = 11 : i64} {
  func.func @_actor_critic_kernel(%arg0: i32, %arg1: memref<128x16xbf16, #tpu.memory_space<vmem>>, %arg2: memref<320x128xbf16, #tpu.memory_space<vmem>>, %arg3: memref<128x128xf32, #tpu.memory_space<vmem>>) attributes {dimension_semantics = [#tpu.dimension_semantics<parallel>], iteration_bounds = array<i64: 2>, scalar_prefetch = 0 : i64, scratch_operands = 0 : i64, tpu.core_type = #tpu.core_type<tc>, window_params = [{transform_indices = @transform_0, window_bounds = array<i64: 128, 16>}, {pipeline_mode = #tpu.pipeline_mode<synchronous>, transform_indices = @transform_1, window_bounds = array<i64: 320, 128>}, {transform_indices = @transform_2, window_bounds = array<i64: 128, 128>}]} {
    %c0 = arith.constant 0 : index
    %c0_0 = arith.constant 0 : index
    %0 = vector.load %arg2[%c0, %c0_0] : memref<320x128xbf16, #tpu.memory_space<vmem>>, vector<16x128xbf16>
    %c16 = arith.constant 16 : index
    %c0_1 = arith.constant 0 : index
    %1 = vector.load %arg2[%c16, %c0_1] : memref<320x128xbf16, #tpu.memory_space<vmem>>, vector<1x128xbf16>
    %2 = arith.extf %1 : vector<1x128xbf16> to vector<1x128xf32>
    %c32 = arith.constant 32 : index
    %c0_2 = arith.constant 0 : index
    %3 = vector.load %arg2[%c32, %c0_2] : memref<320x128xbf16, #tpu.memory_space<vmem>>, vector<128x128xbf16>
    %c160 = arith.constant 160 : index
    %c0_3 = arith.constant 0 : index
    %4 = vector.load %arg2[%c160, %c0_3] : memref<320x128xbf16, #tpu.memory_space<vmem>>, vector<1x128xbf16>
    %5 = arith.extf %4 : vector<1x128xbf16> to vector<1x128xf32>
    %c176 = arith.constant 176 : index
    %c0_4 = arith.constant 0 : index
    %6 = vector.load %arg2[%c176, %c0_4] : memref<320x128xbf16, #tpu.memory_space<vmem>>, vector<128x128xbf16>
    %c304 = arith.constant 304 : index
    %c0_5 = arith.constant 0 : index
    %7 = vector.load %arg2[%c304, %c0_5] : memref<320x128xbf16, #tpu.memory_space<vmem>>, vector<1x128xbf16>
    %8 = arith.extf %7 : vector<1x128xbf16> to vector<1x128xf32>
    %c0_6 = arith.constant 0 : index
    %c0_7 = arith.constant 0 : index
    %9 = vector.load %arg1[%c0_6, %c0_7] : memref<128x16xbf16, #tpu.memory_space<vmem>>, vector<128x16xbf16>
    %cst = arith.constant dense<0.000000e+00> : vector<128x128xf32>
    %10 = tpu.matmul %9, %0, %cst {dimension_numbers = #tpu.dot_dimension_numbers<[1], [0], [0], [1], [0, 0, 1, 1], [], []>} : vector<128x16xbf16>, vector<16x128xbf16>, vector<128x128xf32> -> vector<128x128xf32>
    %11 = vector.broadcast %2 : vector<1x128xf32> to vector<128x128xf32>
    %12 = arith.addf %10, %11 : vector<128x128xf32>
    %cst_8 = arith.constant 0.000000e+00 : f32
    %13 = vector.broadcast %cst_8 : f32 to vector<128x128xf32>
    %14 = arith.maximumf %12, %13 : vector<128x128xf32>
    %15 = arith.truncf %14 : vector<128x128xf32> to vector<128x128xbf16>
    %cst_9 = arith.constant dense<0.000000e+00> : vector<128x128xf32>
    %16 = tpu.matmul %15, %3, %cst_9 {dimension_numbers = #tpu.dot_dimension_numbers<[1], [0], [0], [1], [0, 0, 1, 1], [], []>} : vector<128x128xbf16>, vector<128x128xbf16>, vector<128x128xf32> -> vector<128x128xf32>
    %17 = vector.broadcast %5 : vector<1x128xf32> to vector<128x128xf32>
    %18 = arith.addf %16, %17 : vector<128x128xf32>
    %cst_10 = arith.constant 0.000000e+00 : f32
    %19 = vector.broadcast %cst_10 : f32 to vector<128x128xf32>
    %20 = arith.maximumf %18, %19 : vector<128x128xf32>
    %21 = arith.truncf %20 : vector<128x128xf32> to vector<128x128xbf16>
    %cst_11 = arith.constant dense<0.000000e+00> : vector<128x128xf32>
    %22 = tpu.matmul %21, %6, %cst_11 {dimension_numbers = #tpu.dot_dimension_numbers<[1], [0], [0], [1], [0, 0, 1, 1], [], []>} : vector<128x128xbf16>, vector<128x128xbf16>, vector<128x128xf32> -> vector<128x128xf32>
    %23 = vector.broadcast %8 : vector<1x128xf32> to vector<128x128xf32>
    %24 = arith.addf %22, %23 : vector<128x128xf32>
    %c0_12 = arith.constant 0 : index
    %c0_13 = arith.constant 0 : index
    %25 = vector.load %arg3[%c0_12, %c0_13] : memref<128x128xf32, #tpu.memory_space<vmem>>, vector<128x128xf32>
    tpu.vector_store %arg3[%c0_12, %c0_13], %24 {strides = array<i32>} : memref<128x128xf32, #tpu.memory_space<vmem>>, vector<128x128xf32>,
    return
  }
  func.func @transform_0(%arg0: i32) -> (i32, i32) {
    %c0_i32 = arith.constant 0 : i32
    %c0_i32_0 = arith.constant 0 : i32
    return %arg0, %c0_i32 : i32, i32
  }
  func.func @transform_1(%arg0: i32) -> (i32, i32) {
    %c0_i32 = arith.constant 0 : i32
    %c0_i32_0 = arith.constant 0 : i32
    %c0_i32_1 = arith.constant 0 : i32
    return %c0_i32, %c0_i32_0 : i32, i32
  }
  func.func @transform_2(%arg0: i32) -> (i32, i32) {
    %c0_i32 = arith.constant 0 : i32
    %c0_i32_0 = arith.constant 0 : i32
    return %arg0, %c0_i32 : i32, i32
  }
}

</mosaic_0001>

<llo_original>
// kernel: _lambda_.1
$region0: #{_lambda_.1}
  #allocation0 [shape = 'u32[]', space=smem, size = 0x4, offset = 0x4, fixed_abs, tag = 'smem constant byte address 0x4 - core index']
  #allocation1 [shape = 'u32[144,128]{1,0:T(1,128)}', space=vmem, size = 0x12000, scoped, tag = 'internal scratch']
  %s0 = inlined_call_operand.vmem [shape: bf16[256,16], index: 0, kind: input, shape index: {}]
  %s1 = inlined_call_operand.vmem [shape: bf16[320,128], index: 1, kind: input, shape index: {}]
  %s2 = inlined_call_operand.vmem [shape: f32[256,128], index: 2, kind: output, shape index: {}]
  %s3 = sld [smem:[#allocation0]]
  $region41: #{_lambda_.1} parent=0
    _
  %s5 = ssub.s32 1, %s3
  %s6 = scalar_select 0, %s5, %s3
  loop: start=0, step=1, limit=4
  $region2: #{_lambda_.1} parent=0 // loop_pre_header
    _
  $region3: #{_lambda_.1} parent=0 // loop_header
    %s8 = sphi 0, %s12
    %p9 = scmp.ge.s32.totalorder %s8, 4
    %s18 = sphi 0, %s20
    %s21 = sphi 0, %s18
    %s22 = sphi 0, %s21
    %s38 = sphi 0, %s22
    %s42 = sphi 0, %s42
    %s44 = sphi 0, %s42
    %s45 = sphi 0, %s44
    %s59 = sphi 0, %s45
    %s65 = sphi 0, %s67
    %s68 = sphi 0, %s65
    %s69 = sphi 0, %s68
    %s85 = sphi 0, %s69
  $region4: #{_lambda_.1} parent=0 // loop_header_branch
    %11 = sbr.rel (%p9) target = $region8
  $region5: #{_lambda_.1} parent=0 // loop_body
    %s13 = ssub.s32 %s8, 1
    %s14 = ssub.s32 %s8, 2
    %s15 = sadd.s32 %s8, 1
    %s16 = ssub.s32 %s8, %s15
    %p17 = scmp.eq.s32.totalorder %s16, 0
    %s19 = sadd.s32 %s18, 1
    %s20 = scalar_select %p17, %s18, %s19
    %p23 = pneg %p17
    %p24 = scmp.eq.s32.totalorder %s8, 1
    %p25 = por %p23, %p24
    %p26 = scmp.ne.s32.totalorder %s18, %s21
    %p27 = scmp.eq.s32.totalorder %s8, 0
    %p28 = por %p26, %p27
    %p29 = scmp.ne.s32.totalorder %s18, %s21
    %p30 = scmp.eq.s32.totalorder %s13, 1
    %p31 = por %p29, %p30
    %p32 = scmp.ne.s32.totalorder %s21, %s22
    %p33 = scmp.eq.s32.totalorder %s13, 0
    %p34 = por %p32, %p33
    %p35 = scmp.ne.s32.totalorder %s21, %s22
    %p36 = scmp.eq.s32.totalorder %s14, 1
    %p37 = por %p35, %p36
    %p39 = scmp.ne.s32.totalorder %s22, %s38
    %p40 = scmp.eq.s32.totalorder %s14, 0
    %p41 = por %p39, %p40
    %s43 = sadd.s32 %s42, 1
    %p46 = scmp.eq.s32.totalorder %s8, 1
    %p47 = scmp.ne.s32.totalorder %s42, %s44
    %p48 = scmp.eq.s32.totalorder %s8, 0
    %p49 = por %p47, %p48
    %p50 = scmp.ne.s32.totalorder %s42, %s44
    %p51 = scmp.eq.s32.totalorder %s13, 1
    %p52 = por %p50, %p51
    %p53 = scmp.ne.s32.totalorder %s44, %s45
    %p54 = scmp.eq.s32.totalorder %s13, 0
    %p55 = por %p53, %p54
    %p56 = scmp.ne.s32.totalorder %s44, %s45
    %p57 = scmp.eq.s32.totalorder %s14, 1
    %p58 = por %p56, %p57
    %p60 = scmp.ne.s32.totalorder %s45, %s59
    %p61 = scmp.eq.s32.totalorder %s14, 0
    %p62 = por %p60, %p61
    %s63 = ssub.s32 %s8, %s15
    %p64 = scmp.eq.s32.totalorder %s63, 0
    %s66 = sadd.s32 %s65, 1
    %s67 = scalar_select %p64, %s65, %s66
    %p70 = pneg %p64
    %p71 = scmp.eq.s32.totalorder %s8, 1
    %p72 = por %p70, %p71
    %p73 = scmp.ne.s32.totalorder %s65, %s68
    %p74 = scmp.eq.s32.totalorder %s8, 0
    %p75 = por %p73, %p74
    %p76 = scmp.ne.s32.totalorder %s65, %s68
    %p77 = scmp.eq.s32.totalorder %s13, 1
    %p78 = por %p76, %p77
    %p79 = scmp.ne.s32.totalorder %s68, %s69
    %p80 = scmp.eq.s32.totalorder %s13, 0
    %p81 = por %p79, %p80
    %p82 = scmp.ne.s32.totalorder %s68, %s69
    %p83 = scmp.eq.s32.totalorder %s14, 1
    %p84 = por %p82, %p83
    %p86 = scmp.ne.s32.totalorder %s69, %s85
    %p87 = scmp.eq.s32.totalorder %s14, 0
    %p88 = por %p86, %p87
    %p89 = scmp.le.s32.totalorder 1, %s8
    %p90 = scmp.lt.s32.totalorder %s8, 3
    %p91 = pnand %p89, %p90
    %p92 = pneg %p91
    // Predicated region
    $region9: #{_lambda_.1} parent=5 // pred_check
      _
    $region10: #{_lambda_.1} parent=5 // pred_check_branch
      %94 = sbr.rel (%p91) target = $region12
    $region11: #{_lambda_.1} parent=5 // pred_region
      %s95 = ssub.s32 %s8, 1
      // Predicated region
      $region13: #{_lambda_.1} parent=11 // pred_check
        %p96 = pneg %p55
      $region14: #{_lambda_.1} parent=11 // pred_check_branch
        %98 = sbr.rel (%p96) target = $region16
      $region15: #{_lambda_.1} parent=11 // pred_region
        _
      $region16: #{_lambda_.1} parent=11 // pred_fallthru
        _
    $region12: #{_lambda_.1} parent=5 // pred_fallthru
      _
    %p99 = scmp.lt.s32.totalorder %s8, 2
    // Predicated region
    $region17: #{_lambda_.1} parent=5 // pred_check
      %p100 = pneg %p99
    $region18: #{_lambda_.1} parent=5 // pred_check_branch
      %102 = sbr.rel (%p100) target = $region20
    $region19: #{_lambda_.1} parent=5 // pred_region
      // Predicated region
      $region21: #{_lambda_.1} parent=19 // pred_check
        %p103 = pneg %p28
      $region22: #{_lambda_.1} parent=19 // pred_check_branch
        %105 = sbr.rel (%p103) target = $region24
      $region23: #{_lambda_.1} parent=19 // pred_region
        %s106 = smul.u32 16, %s8
        %p107 = scmp.lt.s32.totalorder %s106, 31
        %s108 = scalar_select %p107, %s106, 31
        %s109 = smul.addr %s108, 4
        %s110 = scalar_lea.vmem %s0, %s109
        %s111 = smul.u32 16, %s8
      $region24: #{_lambda_.1} parent=19 // pred_fallthru
        _
    $region20: #{_lambda_.1} parent=5 // pred_fallthru
      _
    %p112 = scmp.le.s32.totalorder 1, %s8
    %p113 = scmp.lt.s32.totalorder %s8, 3
    %p114 = pnand %p112, %p113
    %p115 = pneg %p114
    // Predicated region
    $region25: #{_lambda_.1} parent=5 // pred_check
      _
    $region26: #{_lambda_.1} parent=5 // pred_check_branch
      %117 = sbr.rel (%p114) target = $region28
    $region27: #{_lambda_.1} parent=5 // pred_region
      %s118 = ssub.s32 %s8, 1
      %s119 = smul.u32 16, %s13
      %p120 = scmp.lt.s32.totalorder %s119, 31
      %s121 = scalar_select %p120, %s119, 31
      %s122 = smul.addr %s121, 4
      %s123 = scalar_lea.vmem %s0, %s122
      %p124 = pneg %p34
      %p125 = pneg %p31
      %p126 = pneg %p55
      %p127 = pneg %p52
      %p128 = pneg %p81
      %p129 = pneg %p78
      %s130 = smul.u32 16, %s13
      %p131 = scmp.lt.s32.totalorder %s130, 31
      %s132 = scalar_select %p131, %s130, 31
      %s133 = smul.addr %s132, 8
      %s134 = scalar_lea.vmem %s2, %s133
      %s135 = smul.u32 16, %s13
      %p136 = scmp.lt.s32.totalorder %s135, 31
      %s137 = scalar_select %p136, %s135, 31
      %s138 = smul.addr %s137, 4
      %s139 = scalar_lea.vmem %s0, %s138
      %s140 = smul.u32 16, %s13
      %s141 = smul.u32 16, %s13
      %p142 = scmp.lt.s32.totalorder %s141, 31
      %s143 = scalar_select %p142, %s141, 31
      %s144 = smul.addr %s143, 8
      %s145 = scalar_lea.vmem %s2, %s144
      %s146 = smul.u32 16, %s13
      %v148 = vld [vmem:[%s1] sm:$0xf]
      %v149 = vld [vmem:[%s1 + $0x4] sm:$0xf]
      %v150 = vld [vmem:[%s1 + $0x8] sm:$0x1]
      %v151 = vunpack.c.l.bf16 %v150
      %v152 = vld [vmem:[%s1 + $0x10] sm:$0xf]
      %v153 = vld [vmem:[%s1 + $0x14] sm:$0xf]
      %v154 = vld [vmem:[%s1 + $0x18] sm:$0xf]
      %v155 = vld [vmem:[%s1 + $0x1c] sm:$0xf]
      %v156 = vld [vmem:[%s1 + $0x20] sm:$0xf]
      %v157 = vld [vmem:[%s1 + $0x24] sm:$0xf]
      %v158 = vld [vmem:[%s1 + $0x28] sm:$0xf]
      %v159 = vld [vmem:[%s1 + $0x2c] sm:$0xf]
      %v160 = vld [vmem:[%s1 + $0x30] sm:$0xf]
      %v161 = vld [vmem:[%s1 + $0x34] sm:$0xf]
      %v162 = vld [vmem:[%s1 + $0x38] sm:$0xf]
      %v163 = vld [vmem:[%s1 + $0x3c] sm:$0xf]
      %v164 = vld [vmem:[%s1 + $0x40] sm:$0xf]
      %v165 = vld [vmem:[%s1 + $0x44] sm:$0xf]
      %v166 = vld [vmem:[%s1 + $0x48] sm:$0xf]
      %v167 = vld [vmem:[%s1 + $0x4c] sm:$0xf]
      %v168 = vld [vmem:[%s1 + $0x50] sm:$0x1]
      %v169 = vunpack.c.l.bf16 %v168
      %v170 = vld [vmem:[%s1 + $0x58] sm:$0xf]
      %v171 = vld [vmem:[%s1 + $0x5c] sm:$0xf]
      %v172 = vld [vmem:[%s1 + $0x60] sm:$0xf]
      %v173 = vld [vmem:[%s1 + $0x64] sm:$0xf]
      %v174 = vld [vmem:[%s1 + $0x68] sm:$0xf]
      %v175 = vld [vmem:[%s1 + $0x6c] sm:$0xf]
      %v176 = vld [vmem:[%s1 + $0x70] sm:$0xf]
      %v177 = vld [vmem:[%s1 + $0x74] sm:$0xf]
      %v178 = vld [vmem:[%s1 + $0x78] sm:$0xf]
      %v179 = vld [vmem:[%s1 + $0x7c] sm:$0xf]
      %v180 = vld [vmem:[%s1 + $0x80] sm:$0xf]
      %v181 = vld [vmem:[%s1 + $0x84] sm:$0xf]
      %v182 = vld [vmem:[%s1 + $0x88] sm:$0xf]
      %v183 = vld [vmem:[%s1 + $0x8c] sm:$0xf]
      %v184 = vld [vmem:[%s1 + $0x90] sm:$0xf]
      %v185 = vld [vmem:[%s1 + $0x94] sm:$0xf]
      %v186 = vld [vmem:[%s1 + $0x98] sm:$0x1]
      %v187 = vunpack.c.l.bf16 %v186
      %v188 = vld [vmem:[%s139] sm:$0xf]
      %v189 = vld [vmem:[%s139 + $0x4] sm:$0xf]
      %v190 = vld [vmem:[%s139 + $0x8] sm:$0xf]
      %v191 = vld [vmem:[%s139 + $0xc] sm:$0xf]
      %v192 = vld [vmem:[%s139 + $0x10] sm:$0xf]
      %v193 = vld [vmem:[%s139 + $0x14] sm:$0xf]
      %v194 = vld [vmem:[%s139 + $0x18] sm:$0xf]
      %v195 = vld [vmem:[%s139 + $0x1c] sm:$0xf]
      %v196 = vld [vmem:[%s139 + $0x20] sm:$0xf]
      %v197 = vld [vmem:[%s139 + $0x24] sm:$0xf]
      %v198 = vld [vmem:[%s139 + $0x28] sm:$0xf]
      %v199 = vld [vmem:[%s139 + $0x2c] sm:$0xf]
      %v200 = vld [vmem:[%s139 + $0x30] sm:$0xf]
      %v201 = vld [vmem:[%s139 + $0x34] sm:$0xf]
      %v202 = vld [vmem:[%s139 + $0x38] sm:$0xf]
      %v203 = vld [vmem:[%s139 + $0x3c] sm:$0xf]
      %v204 = vlaneseq
      %v205 = vshrl.u32 %v204, 7
      %v206 = vsub.s32 0, %v205
      %v207 = vrot.slane %v151, %v206
      %v224 = vunpack.c.l.b16 %v188
      %v225 = vunpack.c.l.b16 %v189
      %v226 = vunpack.c.l.b16 %v190
      %v227 = vunpack.c.l.b16 %v191
      %v228 = vunpack.c.l.b16 %v192
      %v229 = vunpack.c.l.b16 %v193
      %v230 = vunpack.c.l.b16 %v194
      %v231 = vunpack.c.l.b16 %v195
      %v232 = vunpack.c.l.b16 %v196
      %v233 = vunpack.c.l.b16 %v197
      %v234 = vunpack.c.l.b16 %v198
      %v235 = vunpack.c.l.b16 %v199
      %v236 = vunpack.c.l.b16 %v200
      %v237 = vunpack.c.l.b16 %v201
      %v238 = vunpack.c.l.b16 %v202
      %v239 = vunpack.c.l.b16 %v203
      %v240 = vpack.c.b16 %v225, %v224
      %v241 = vpack.c.b16 %v227, %v226
      %v242 = vpack.c.b16 %v229, %v228
      %v243 = vpack.c.b16 %v231, %v230
      %v244 = vpack.c.b16 %v233, %v232
      %v245 = vpack.c.b16 %v235, %v234
      %v246 = vpack.c.b16 %v237, %v236
      %v247 = vpack.c.b16 %v239, %v238
      %v250 = vunpack.c.l.b16 %v148
      %v251 = vunpack.c.l.b16 %v149
      %v252 = vpack.c.b16 %v251, %v250
      %vm254 = vcmask 130048
      %v256 = vsel %vm254, %v240, 0
      %v259 = vsel %vm254, %v241, 0
      %v262 = vsel %vm254, %v242, 0
      %v265 = vsel %vm254, %v243, 0
      %v268 = vsel %vm254, %v244, 0
      %v271 = vsel %vm254, %v245, 0
      %v274 = vsel %vm254, %v246, 0
      %v277 = vsel %vm254, %v247, 0
      %279 = vmatprep.subr.bf16.mxu0 0
      %280 = vmatpush1.bf16.msra.mxu0 %v252
      %281 = vmatprep.subr.bf16.mxu0 0
      %282 = vmatpush1.bf16.msra.mxu0 0
      %283 = vmatprep.subr.bf16.mxu0 0
      %284 = vmatpush1.bf16.msra.mxu0 0
      %285 = vmatprep.subr.bf16.mxu0 0
      %286 = vmatpush1.bf16.msra.mxu0 0
      %287 = vmatprep.subr.bf16.mxu0 0
      %288 = vmatpush1.bf16.msra.mxu0 0
      %289 = vmatprep.subr.bf16.mxu0 0
      %290 = vmatpush1.bf16.msra.mxu0 0
      %291 = vmatprep.subr.bf16.mxu0 0
      %292 = vmatpush1.bf16.msra.mxu0 0
      %293 = vmatprep.subr.bf16.mxu0 0
      %294 = vmatpush1.bf16.msra.mxu0 0
      %295 = vmatprep.subr.bf16.mxu0 0
      %296 = vmatpush1.bf16.msra.mxu0 0
      %297 = vmatprep.subr.bf16.mxu0 0
      %298 = vmatpush1.bf16.msra.mxu0 0
      %299 = vmatprep.subr.bf16.mxu0 0
      %300 = vmatpush1.bf16.msra.mxu0 0
      %301 = vmatprep.subr.bf16.mxu0 0
      %302 = vmatpush1.bf16.msra.mxu0 0
      %303 = vmatprep.subr.bf16.mxu0 0
      %304 = vmatpush1.bf16.msra.mxu0 0
      %305 = vmatprep.subr.bf16.mxu0 0
      %306 = vmatpush1.bf16.msra.mxu0 0
      %307 = vmatprep.subr.bf16.mxu0 0
      %308 = vmatpush1.bf16.msra.mxu0 0
      %309 = vmatprep.subr.bf16.mxu0 0
      %310 = vmatpush1.bf16.msra.mxu0 0
      %311 = vmatprep.mubr.bf16.mxu0 0
      %312 = vmatmul.mubr.bf16.gmra.mrb[0].mxu0 %v256
      %v313 = vpop.f32.mrb[0].mxu0
      %v314 = vadd.f32 %v207, %v313
      %v315 = vpop.f32.mrb[0].mxu0
      %v316 = vpop.f32.mrb[0].mxu0
      %v317 = vadd.f32 %v207, %v316
      %v318 = vpop.f32.mrb[0].mxu0
      %319 = vmatprep.mubr.bf16.mxu0 0
      %320 = vmatmul.mubr.bf16.gmra.mrb[0].mxu0 %v259
      %v321 = vpop.f32.mrb[0].mxu0
      %v322 = vadd.f32 %v207, %v321
      %v323 = vpop.f32.mrb[0].mxu0
      %v324 = vpop.f32.mrb[0].mxu0
      %v325 = vadd.f32 %v207, %v324
      %v326 = vpop.f32.mrb[0].mxu0
      %327 = vmatprep.mubr.bf16.mxu0 0
      %328 = vmatmul.mubr.bf16.gmra.mrb[0].mxu0 %v262
      %v329 = vpop.f32.mrb[0].mxu0
      %v330 = vadd.f32 %v207, %v329
      %v331 = vpop.f32.mrb[0].mxu0
      %v332 = vpop.f32.mrb[0].mxu0
      %v333 = vadd.f32 %v207, %v332
      %v334 = vpop.f32.mrb[0].mxu0
      %335 = vmatprep.mubr.bf16.mxu0 0
      %336 = vmatmul.mubr.bf16.gmra.mrb[0].mxu0 %v265
      %v337 = vpop.f32.mrb[0].mxu0
      %v338 = vadd.f32 %v207, %v337
      %v339 = vpop.f32.mrb[0].mxu0
      %v340 = vpop.f32.mrb[0].mxu0
      %v341 = vadd.f32 %v207, %v340
      %v342 = vpop.f32.mrb[0].mxu0
      %343 = vmatprep.mubr.bf16.mxu0 0
      %344 = vmatmul.mubr.bf16.gmra.mrb[0].mxu0 %v268
      %v345 = vpop.f32.mrb[0].mxu0
      %v346 = vadd.f32 %v207, %v345
      %v347 = vpop.f32.mrb[0].mxu0
      %v348 = vpop.f32.mrb[0].mxu0
      %v349 = vadd.f32 %v207, %v348
      %v350 = vpop.f32.mrb[0].mxu0
      %351 = vmatprep.mubr.bf16.mxu0 0
      %352 = vmatmul.mubr.bf16.gmra.mrb[0].mxu0 %v271
      %v353 = vpop.f32.mrb[0].mxu0
      %v354 = vadd.f32 %v207, %v353
      %v355 = vpop.f32.mrb[0].mxu0
      %v356 = vpop.f32.mrb[0].mxu0
      %v357 = vadd.f32 %v207, %v356
      %v358 = vpop.f32.mrb[0].mxu0
      %359 = vmatprep.mubr.bf16.mxu0 0
      %360 = vmatmul.mubr.bf16.gmra.mrb[0].mxu0 %v274
      %v361 = vpop.f32.mrb[0].mxu0
      %v362 = vadd.f32 %v207, %v361
      %v363 = vpop.f32.mrb[0].mxu0
      %v364 = vpop.f32.mrb[0].mxu0
      %v365 = vadd.f32 %v207, %v364
      %v366 = vpop.f32.mrb[0].mxu0
      %367 = vmatprep.mubr.bf16.mxu0 0
      %368 = vmatmul.mubr.bf16.gmra.mrb[0].mxu0 %v277
      %v369 = vpop.f32.mrb[0].mxu0
      %v370 = vadd.f32 %v207, %v369
      %v371 = vpop.f32.mrb[0].mxu0
      %v372 = vpop.f32.mrb[0].mxu0
      %v373 = vadd.f32 %v207, %v372
      %v374 = vpop.f32.mrb[0].mxu0
      %375 = vdwg.mxu0
      %v376 = vmax.f32 %v314, 0.0
      %v377 = vmax.f32 %v317, 0.0
      %v378 = vmax.f32 %v322, 0.0
      %v379 = vmax.f32 %v325, 0.0
      %v380 = vmax.f32 %v330, 0.0
      %v381 = vmax.f32 %v333, 0.0
      %v382 = vmax.f32 %v338, 0.0
      %v383 = vmax.f32 %v341, 0.0
      %v384 = vmax.f32 %v346, 0.0
      %v385 = vmax.f32 %v349, 0.0
      %v386 = vmax.f32 %v354, 0.0
      %v387 = vmax.f32 %v357, 0.0
      %v388 = vmax.f32 %v362, 0.0
      %v389 = vmax.f32 %v365, 0.0
      %v390 = vmax.f32 %v370, 0.0
      %v391 = vmax.f32 %v373, 0.0
      %v392 = vpack.c.bf16 %v377, %v376
      %v393 = vpack.c.bf16 %v379, %v378
      %v394 = vpack.c.bf16 %v381, %v380
      %v395 = vpack.c.bf16 %v383, %v382
      %v396 = vpack.c.bf16 %v385, %v384
      %v397 = vpack.c.bf16 %v387, %v386
      %v398 = vpack.c.bf16 %v389, %v388
      %v399 = vpack.c.bf16 %v391, %v390
      %v400 = vlaneseq
      %v401 = vshrl.u32 %v400, 7
      %v402 = vsub.s32 0, %v401
      %v403 = vrot.slane %v169, %v402
      %v420 = vunpack.c.l.b16 %v152
      %v421 = vunpack.c.l.b16 %v153
      %v422 = vunpack.c.l.b16 %v154
      %v423 = vunpack.c.l.b16 %v155
      %v424 = vunpack.c.l.b16 %v156
      %v425 = vunpack.c.l.b16 %v157
      %v426 = vunpack.c.l.b16 %v158
      %v427 = vunpack.c.l.b16 %v159
      %v428 = vunpack.c.l.b16 %v160
      %v429 = vunpack.c.l.b16 %v161
      %v430 = vunpack.c.l.b16 %v162
      %v431 = vunpack.c.l.b16 %v163
      %v432 = vunpack.c.l.b16 %v164
      %v433 = vunpack.c.l.b16 %v165
      %v434 = vunpack.c.l.b16 %v166
      %v435 = vunpack.c.l.b16 %v167
      %v436 = vpack.c.b16 %v421, %v420
      %v437 = vpack.c.b16 %v423, %v422
      %v438 = vpack.c.b16 %v425, %v424
      %v439 = vpack.c.b16 %v427, %v426
      %v440 = vpack.c.b16 %v429, %v428
      %v441 = vpack.c.b16 %v431, %v430
      %v442 = vpack.c.b16 %v433, %v432
      %v443 = vpack.c.b16 %v435, %v434
      %452 = vmatprep.subr.bf16.mxu0 0
      %453 = vmatpush1.bf16.msra.mxu0 %v436
      %454 = vmatprep.subr.bf16.mxu0 0
      %455 = vmatpush1.bf16.msra.mxu0 %v437
      %456 = vmatprep.subr.bf16.mxu0 0
      %457 = vmatpush1.bf16.msra.mxu0 %v438
      %458 = vmatprep.subr.bf16.mxu0 0
      %459 = vmatpush1.bf16.msra.mxu0 %v439
      %460 = vmatprep.subr.bf16.mxu0 0
      %461 = vmatpush1.bf16.msra.mxu0 %v440
      %462 = vmatprep.subr.bf16.mxu0 0
      %463 = vmatpush1.bf16.msra.mxu0 %v441
      %464 = vmatprep.subr.bf16.mxu0 0
      %465 = vmatpush1.bf16.msra.mxu0 %v442
      %466 = vmatprep.subr.bf16.mxu0 0
      %467 = vmatpush1.bf16.msra.mxu0 %v443
      %468 = vmatprep.subr.bf16.mxu0 0
      %469 = vmatpush1.bf16.msra.mxu0 0
      %470 = vmatprep.subr.bf16.mxu0 0
      %471 = vmatpush1.bf16.msra.mxu0 0
      %472 = vmatprep.subr.bf16.mxu0 0
      %473 = vmatpush1.bf16.msra.mxu0 0
      %474 = vmatprep.subr.bf16.mxu0 0
      %475 = vmatpush1.bf16.msra.mxu0 0
      %476 = vmatprep.subr.bf16.mxu0 0
      %477 = vmatpush1.bf16.msra.mxu0 0
      %478 = vmatprep.subr.bf16.mxu0 0
      %479 = vmatpush1.bf16.msra.mxu0 0
      %480 = vmatprep.subr.bf16.mxu0 0
      %481 = vmatpush1.bf16.msra.mxu0 0
      %482 = vmatprep.subr.bf16.mxu0 0
      %483 = vmatpush1.bf16.msra.mxu0 0
      %484 = vmatprep.mubr.bf16.mxu0 0
      %485 = vmatmul.mubr.bf16.gmra.mrb[0].mxu0 %v392
      %v486 = vpop.f32.mrb[0].mxu0
      %v487 = vadd.f32 %v403, %v486
      %v488 = vpop.f32.mrb[0].mxu0
      %v489 = vpop.f32.mrb[0].mxu0
      %v490 = vadd.f32 %v403, %v489
      %v491 = vpop.f32.mrb[0].mxu0
      %492 = vmatprep.mubr.bf16.mxu0 0
      %493 = vmatmul.mubr.bf16.gmra.mrb[0].mxu0 %v393
      %v494 = vpop.f32.mrb[0].mxu0
      %v495 = vadd.f32 %v403, %v494
      %v496 = vpop.f32.mrb[0].mxu0
      %v497 = vpop.f32.mrb[0].mxu0
      %v498 = vadd.f32 %v403, %v497
      %v499 = vpop.f32.mrb[0].mxu0
      %500 = vmatprep.mubr.bf16.mxu0 0
      %501 = vmatmul.mubr.bf16.gmra.mrb[0].mxu0 %v394
      %v502 = vpop.f32.mrb[0].mxu0
      %v503 = vadd.f32 %v403, %v502
      %v504 = vpop.f32.mrb[0].mxu0
      %v505 = vpop.f32.mrb[0].mxu0
      %v506 = vadd.f32 %v403, %v505
      %v507 = vpop.f32.mrb[0].mxu0
      %508 = vmatprep.mubr.bf16.mxu0 0
      %509 = vmatmul.mubr.bf16.gmra.mrb[0].mxu0 %v395
      %v510 = vpop.f32.mrb[0].mxu0
      %v511 = vadd.f32 %v403, %v510
      %v512 = vpop.f32.mrb[0].mxu0
      %v513 = vpop.f32.mrb[0].mxu0
      %v514 = vadd.f32 %v403, %v513
      %v515 = vpop.f32.mrb[0].mxu0
      %516 = vmatprep.mubr.bf16.mxu0 0
      %517 = vmatmul.mubr.bf16.gmra.mrb[0].mxu0 %v396
      %v518 = vpop.f32.mrb[0].mxu0
      %v519 = vadd.f32 %v403, %v518
      %v520 = vpop.f32.mrb[0].mxu0
      %v521 = vpop.f32.mrb[0].mxu0
      %v522 = vadd.f32 %v403, %v521
      %v523 = vpop.f32.mrb[0].mxu0
      %524 = vmatprep.mubr.bf16.mxu0 0
      %525 = vmatmul.mubr.bf16.gmra.mrb[0].mxu0 %v397
      %v526 = vpop.f32.mrb[0].mxu0
      %v527 = vadd.f32 %v403, %v526
      %v528 = vpop.f32.mrb[0].mxu0
      %v529 = vpop.f32.mrb[0].mxu0
      %v530 = vadd.f32 %v403, %v529
      %v531 = vpop.f32.mrb[0].mxu0
      %532 = vmatprep.mubr.bf16.mxu0 0
      %533 = vmatmul.mubr.bf16.gmra.mrb[0].mxu0 %v398
      %v534 = vpop.f32.mrb[0].mxu0
      %v535 = vadd.f32 %v403, %v534
      %v536 = vpop.f32.mrb[0].mxu0
      %v537 = vpop.f32.mrb[0].mxu0
      %v538 = vadd.f32 %v403, %v537
      %v539 = vpop.f32.mrb[0].mxu0
      %540 = vmatprep.mubr.bf16.mxu0 0
      %541 = vmatmul.mubr.bf16.gmra.mrb[0].mxu0 %v399
      %v542 = vpop.f32.mrb[0].mxu0
      %v543 = vadd.f32 %v403, %v542
      %v544 = vpop.f32.mrb[0].mxu0
      %v545 = vpop.f32.mrb[0].mxu0
      %v546 = vadd.f32 %v403, %v545
      %v547 = vpop.f32.mrb[0].mxu0
      %548 = vdwg.mxu0
      %v549 = vmax.f32 %v487, 0.0
      %v550 = vmax.f32 %v490, 0.0
      %v551 = vmax.f32 %v495, 0.0
      %v552 = vmax.f32 %v498, 0.0
      %v553 = vmax.f32 %v503, 0.0
      %v554 = vmax.f32 %v506, 0.0
      %v555 = vmax.f32 %v511, 0.0
      %v556 = vmax.f32 %v514, 0.0
      %v557 = vmax.f32 %v519, 0.0
      %v558 = vmax.f32 %v522, 0.0
      %v559 = vmax.f32 %v527, 0.0
      %v560 = vmax.f32 %v530, 0.0
      %v561 = vmax.f32 %v535, 0.0
      %v562 = vmax.f32 %v538, 0.0
      %v563 = vmax.f32 %v543, 0.0
      %v564 = vmax.f32 %v546, 0.0
      %v565 = vpack.c.bf16 %v550, %v549
      %v566 = vpack.c.bf16 %v552, %v551
      %v567 = vpack.c.bf16 %v554, %v553
      %v568 = vpack.c.bf16 %v556, %v555
      %v569 = vpack.c.bf16 %v558, %v557
      %v570 = vpack.c.bf16 %v560, %v559
      %v571 = vpack.c.bf16 %v562, %v561
      %v572 = vpack.c.bf16 %v564, %v563
      %v573 = vlaneseq
      %v574 = vshrl.u32 %v573, 7
      %v575 = vsub.s32 0, %v574
      %v576 = vrot.slane %v187, %v575
      %v593 = vunpack.c.l.b16 %v170
      %v594 = vunpack.c.l.b16 %v171
      %v595 = vunpack.c.l.b16 %v172
      %v596 = vunpack.c.l.b16 %v173
      %v597 = vunpack.c.l.b16 %v174
      %v598 = vunpack.c.l.b16 %v175
      %v599 = vunpack.c.l.b16 %v176
      %v600 = vunpack.c.l.b16 %v177
      %v601 = vunpack.c.l.b16 %v178
      %v602 = vunpack.c.l.b16 %v179
      %v603 = vunpack.c.l.b16 %v180
      %v604 = vunpack.c.l.b16 %v181
      %v605 = vunpack.c.l.b16 %v182
      %v606 = vunpack.c.l.b16 %v183
      %v607 = vunpack.c.l.b16 %v184
      %v608 = vunpack.c.l.b16 %v185
      %v609 = vpack.c.b16 %v594, %v593
      %v610 = vpack.c.b16 %v596, %v595
      %v611 = vpack.c.b16 %v598, %v597
      %v612 = vpack.c.b16 %v600, %v599
      %v613 = vpack.c.b16 %v602, %v601
      %v614 = vpack.c.b16 %v604, %v603
      %v615 = vpack.c.b16 %v606, %v605
      %v616 = vpack.c.b16 %v608, %v607
      %625 = vmatprep.subr.bf16.mxu0 0
      %626 = vmatpush1.bf16.msra.mxu0 %v609
      %627 = vmatprep.subr.bf16.mxu0 0
      %628 = vmatpush1.bf16.msra.mxu0 %v610
      %629 = vmatprep.subr.bf16.mxu0 0
      %630 = vmatpush1.bf16.msra.mxu0 %v611
      %631 = vmatprep.subr.bf16.mxu0 0
      %632 = vmatpush1.bf16.msra.mxu0 %v612
      %633 = vmatprep.subr.bf16.mxu0 0
      %634 = vmatpush1.bf16.msra.mxu0 %v613
      %635 = vmatprep.subr.bf16.mxu0 0
      %636 = vmatpush1.bf16.msra.mxu0 %v614
      %637 = vmatprep.subr.bf16.mxu0 0
      %638 = vmatpush1.bf16.msra.mxu0 %v615
      %639 = vmatprep.subr.bf16.mxu0 0
      %640 = vmatpush1.bf16.msra.mxu0 %v616
      %641 = vmatprep.subr.bf16.mxu0 0
      %642 = vmatpush1.bf16.msra.mxu0 0
      %643 = vmatprep.subr.bf16.mxu0 0
      %644 = vmatpush1.bf16.msra.mxu0 0
      %645 = vmatprep.subr.bf16.mxu0 0
      %646 = vmatpush1.bf16.msra.mxu0 0
      %647 = vmatprep.subr.bf16.mxu0 0
      %648 = vmatpush1.bf16.msra.mxu0 0
      %649 = vmatprep.subr.bf16.mxu0 0
      %650 = vmatpush1.bf16.msra.mxu0 0
      %651 = vmatprep.subr.bf16.mxu0 0
      %652 = vmatpush1.bf16.msra.mxu0 0
      %653 = vmatprep.subr.bf16.mxu0 0
      %654 = vmatpush1.bf16.msra.mxu0 0
      %655 = vmatprep.subr.bf16.mxu0 0
      %656 = vmatpush1.bf16.msra.mxu0 0
      %657 = vmatprep.mubr.bf16.mxu0 0
      %658 = vmatmul.mubr.bf16.gmra.mrb[0].mxu0 %v565
      %v659 = vpop.f32.mrb[0].mxu0
      %v660 = vadd.f32 %v576, %v659
      %v661 = vpop.f32.mrb[0].mxu0
      %v662 = vpop.f32.mrb[0].mxu0
      %v663 = vadd.f32 %v576, %v662
      %v664 = vpop.f32.mrb[0].mxu0
      %665 = vmatprep.mubr.bf16.mxu0 0
      %666 = vmatmul.mubr.bf16.gmra.mrb[0].mxu0 %v566
      %v667 = vpop.f32.mrb[0].mxu0
      %v668 = vadd.f32 %v576, %v667
      %v669 = vpop.f32.mrb[0].mxu0
      %v670 = vpop.f32.mrb[0].mxu0
      %v671 = vadd.f32 %v576, %v670
      %v672 = vpop.f32.mrb[0].mxu0
      %673 = vmatprep.mubr.bf16.mxu0 0
      %674 = vmatmul.mubr.bf16.gmra.mrb[0].mxu0 %v567
      %v675 = vpop.f32.mrb[0].mxu0
      %v676 = vadd.f32 %v576, %v675
      %v677 = vpop.f32.mrb[0].mxu0
      %v678 = vpop.f32.mrb[0].mxu0
      %v679 = vadd.f32 %v576, %v678
      %v680 = vpop.f32.mrb[0].mxu0
      %681 = vmatprep.mubr.bf16.mxu0 0
      %682 = vmatmul.mubr.bf16.gmra.mrb[0].mxu0 %v568
      %v683 = vpop.f32.mrb[0].mxu0
      %v684 = vadd.f32 %v576, %v683
      %v685 = vpop.f32.mrb[0].mxu0
      %v686 = vpop.f32.mrb[0].mxu0
      %v687 = vadd.f32 %v576, %v686
      %v688 = vpop.f32.mrb[0].mxu0
      %689 = vmatprep.mubr.bf16.mxu0 0
      %690 = vmatmul.mubr.bf16.gmra.mrb[0].mxu0 %v569
      %v691 = vpop.f32.mrb[0].mxu0
      %v692 = vadd.f32 %v576, %v691
      %v693 = vpop.f32.mrb[0].mxu0
      %v694 = vpop.f32.mrb[0].mxu0
      %v695 = vadd.f32 %v576, %v694
      %v696 = vpop.f32.mrb[0].mxu0
      %697 = vmatprep.mubr.bf16.mxu0 0
      %698 = vmatmul.mubr.bf16.gmra.mrb[0].mxu0 %v570
      %v699 = vpop.f32.mrb[0].mxu0
      %v700 = vadd.f32 %v576, %v699
      %v701 = vpop.f32.mrb[0].mxu0
      %v702 = vpop.f32.mrb[0].mxu0
      %v703 = vadd.f32 %v576, %v702
      %v704 = vpop.f32.mrb[0].mxu0
      %705 = vmatprep.mubr.bf16.mxu0 0
      %706 = vmatmul.mubr.bf16.gmra.mrb[0].mxu0 %v571
      %v707 = vpop.f32.mrb[0].mxu0
      %v708 = vadd.f32 %v576, %v707
      %v709 = vpop.f32.mrb[0].mxu0
      %v710 = vpop.f32.mrb[0].mxu0
      %v711 = vadd.f32 %v576, %v710
      %v712 = vpop.f32.mrb[0].mxu0
      %713 = vmatprep.mubr.bf16.mxu0 0
      %714 = vmatmul.mubr.bf16.gmra.mrb[0].mxu0 %v572
      %v715 = vpop.f32.mrb[0].mxu0
      %v716 = vadd.f32 %v576, %v715
      %v717 = vpop.f32.mrb[0].mxu0
      %v718 = vpop.f32.mrb[0].mxu0
      %v719 = vadd.f32 %v576, %v718
      %v720 = vpop.f32.mrb[0].mxu0
      %721 = vdwg.mxu0
      %722 = vst [vmem:[%s145] sm:$0xff] %v660
      %723 = vst [vmem:[%s145 + $0x8] sm:$0xff] %v663
      %724 = vst [vmem:[%s145 + $0x10] sm:$0xff] %v668
      %725 = vst [vmem:[%s145 + $0x18] sm:$0xff] %v671
      %726 = vst [vmem:[%s145 + $0x20] sm:$0xff] %v676
      %727 = vst [vmem:[%s145 + $0x28] sm:$0xff] %v679
      %728 = vst [vmem:[%s145 + $0x30] sm:$0xff] %v684
      %729 = vst [vmem:[%s145 + $0x38] sm:$0xff] %v687
      %730 = vst [vmem:[%s145 + $0x40] sm:$0xff] %v692
      %731 = vst [vmem:[%s145 + $0x48] sm:$0xff] %v695
      %732 = vst [vmem:[%s145 + $0x50] sm:$0xff] %v700
      %733 = vst [vmem:[%s145 + $0x58] sm:$0xff] %v703
      %734 = vst [vmem:[%s145 + $0x60] sm:$0xff] %v708
      %735 = vst [vmem:[%s145 + $0x68] sm:$0xff] %v711
      %736 = vst [vmem:[%s145 + $0x70] sm:$0xff] %v716
      %737 = vst [vmem:[%s145 + $0x78] sm:$0xff] %v719
      %s738 = smul.u32 16, %s13
      %p739 = scmp.lt.s32.totalorder %s738, 31
      %s740 = scalar_select %p739, %s738, 31
      %s741 = smul.addr %s740, 8
      %s742 = scalar_lea.vmem %s2, %s741
      // Predicated region
      $region29: #{_lambda_.1} parent=27 // pred_check
        %p743 = pneg %p78
      $region30: #{_lambda_.1} parent=27 // pred_check_branch
        %745 = sbr.rel (%p743) target = $region32
      $region31: #{_lambda_.1} parent=27 // pred_region
        %s746 = smul.u32 16, %s13
      $region32: #{_lambda_.1} parent=27 // pred_fallthru
        _
    $region28: #{_lambda_.1} parent=5 // pred_fallthru
      _
    %p747 = scmp.le.s32.totalorder 2, %s8
    // Predicated region
    $region33: #{_lambda_.1} parent=5 // pred_check
      %p748 = pneg %p747
    $region34: #{_lambda_.1} parent=5 // pred_check_branch
      %750 = sbr.rel (%p748) target = $region36
    $region35: #{_lambda_.1} parent=5 // pred_region
      %s751 = ssub.s32 %s8, 2
      // Predicated region
      $region37: #{_lambda_.1} parent=35 // pred_check
        %p752 = pneg %p84
      $region38: #{_lambda_.1} parent=35 // pred_check_branch
        %754 = sbr.rel (%p752) target = $region40
      $region39: #{_lambda_.1} parent=35 // pred_region
        %s755 = smul.u32 16, %s14
        %p756 = scmp.lt.s32.totalorder %s755, 31
        %s757 = scalar_select %p756, %s755, 31
        %s758 = smul.addr %s757, 8
        %s759 = scalar_lea.vmem %s2, %s758
      $region40: #{_lambda_.1} parent=35 // pred_fallthru
        _
    $region36: #{_lambda_.1} parent=5 // pred_fallthru
      _
  $region6: #{_lambda_.1} parent=0 // loop_footer
    %s12 = sadd.s32 1, %s8
  $region7: #{_lambda_.1} parent=0 // loop_footer_branch
    %7 = sbr.rel target = $region3
  $region8: #{_lambda_.1} parent=0 // loop_exit
    _

</llo_original>
